<compile_context>
chip_gen: v7x
topology: tpu7x:2x2x1
jax: 0.10.0
libtpu: 0.0.40
codegen_flags: <defaults>
</compile_context>

<pallas_src>
import jax
import jax.numpy as jnp
from jax.experimental import pallas as pl
from jax.experimental.pallas import tpu as pltpu

_HIDDEN = 256


def _relation_kernel(x_ref, w1_ref, b1_ref, w2_ref, b2_ref, out_ref):
    # x_ref : (TILE_B, D)  bf16   streamed per grid step (double-buffered)
    # w1_ref: (D, 256)     bf16   VMEM-resident
    # b1_ref: (1, 256)     f32    VMEM-resident
    # w2_ref: (1, 256)     f32    VMEM-resident (row form of the (256,1) weight)
    # b2_ref: (1, 1)       f32    SMEM scalar
    # out_ref: (1, TILE_B) f32    lane-dense output row
    x = jnp.maximum(x_ref[...], 0.0)                                   # nn.ReLU()
    # bf16 MXU matmul with f32 accumulation.                           # Linear(D, 256)
    h = jnp.dot(x, w1_ref[...], preferred_element_type=jnp.float32) + b1_ref[...]
    h = jnp.maximum(h, 0.0)                                            # nn.ReLU()
    # Linear(256, 1): contract the hidden dim of h against the w2 row so the
    # result is already lane-dense (1, TILE_B); each output lane only depends on
    # its own row of h, so partial-tile garbage rows stay row-local.
    y = jax.lax.dot_general(
        w2_ref[...], h,
        dimension_numbers=(((1,), (1,)), ((), ())),
        preferred_element_type=jnp.float32,
    )
    out_ref[...] = (y + b2_ref[0, 0]).astype(out_ref.dtype)


def _round_up(n, m):
    return ((n + m - 1) // m) * m


def _choose_tile_b(batch, feat, tile_b, itemsize):
    """Legal, VMEM-budget-aware batch tile.

    * Lane-dense output blocks need tile_b % 128 == 0 unless the tile covers the
      whole batch (full-array blocks are legal for any size).
    * ~12 MiB budget for the double-buffered x stream + f32 hidden intermediate
      keeps us inside v5e's 16 MiB default scoped VMEM and far under v7x's
      64 MiB physical VMEM even at large feature_dim.
    * Batches >= 256 are split into >= 2 grid steps so both v7x TensorCores get
      work under dimension_semantics=("parallel",).
    """
    per_row_bytes = 2 * feat * itemsize + 6 * _HIDDEN   # 2x-buffered x + h slack
    budget_cap = max(128, (12 << 20) // per_row_bytes)
    tile_b = min(int(tile_b), budget_cap)
    if batch >= 256:
        tile_b = min(tile_b, _round_up(pl.cdiv(batch, 2), 128))
    if tile_b >= batch:
        return batch                        # single full block (legal for any B)
    return max(128, (tile_b // 128) * 128)  # multi-step tiles: multiple of 128


def relation_module_forward(x, w1, b1, w2, b2, *, tile_b=2048,
                            compute_dtype=jnp.bfloat16):
    """Fused ReLU -> Linear(D,256) -> ReLU -> Linear(256,1) on TPU via Pallas.

    x : (B, D); w1: (D, 256); b1: (1,256); w2: (256,1); b2: (1,1) (reshapeable).
    Returns (B, 1) float32. The matmul operands run in `compute_dtype`
    (bfloat16 by default) with float32 accumulation.
    """
    B, D = x.shape
    D_in, H = w1.shape
    assert D_in == D and H == _HIDDEN

    itemsize = jnp.dtype(compute_dtype).itemsize
    x_c = x.astype(compute_dtype)          # ReLU commutes exactly with this cast
    w1_c = jnp.asarray(w1, compute_dtype)
    b1_row = jnp.reshape(b1, (1, H)).astype(jnp.float32)
    w2_row = jnp.reshape(w2, (1, H)).astype(jnp.float32)
    b2_s = jnp.reshape(b2, (1, 1)).astype(jnp.float32)

    tile_b = _choose_tile_b(B, D, tile_b, itemsize)
    grid = (pl.cdiv(B, tile_b),)

    # Scoped-VMEM estimate: assume Mosaic double-buffers every input (including
    # the constant-index weights) plus the f32 hidden intermediate; 1.5x headroom.
    vmem_needed = (2 * tile_b * D * itemsize          # x double buffer
                   + 2 * tile_b * 4                   # output row double buffer
                   + 2 * (D * H * itemsize + 2 * H * 4)   # weights / biases
                   + 2 * tile_b * H * 4)              # h + relu temporaries
    vmem_limit = int(min(max(vmem_needed * 3 // 2, 8 << 20), 56 << 20))

    weight_bytes = D * H * itemsize + 2 * H * 4 + 4
    cost = pl.CostEstimate(
        flops=2 * B * D * H + 2 * B * H,
        transcendentals=0,
        bytes_accessed=B * D * itemsize + B * 4 + weight_bytes,
    )

    out_row = pl.pallas_call(
        _relation_kernel,
        out_shape=jax.ShapeDtypeStruct((1, B), jnp.float32),
        grid=grid,
        in_specs=[
            # x: streamed batch tiles (double-buffered by the pipeline).
            pl.BlockSpec((tile_b, D), lambda i: (i, 0)),
            # Weights / biases: same block every step -> VMEM-resident.
            pl.BlockSpec((D, H), lambda i: (0, 0)),
            pl.BlockSpec((1, H), lambda i: (0, 0)),
            pl.BlockSpec((1, H), lambda i: (0, 0)),
            # b2: single scalar in SMEM.
            pl.BlockSpec((1, 1), lambda i: (0, 0),
                         memory_space=pltpu.MemorySpace.SMEM),
        ],
        # Lane-dense output row (biggest store-side lever; worst case was v5e).
        out_specs=pl.BlockSpec((1, tile_b), lambda i: (0, i)),
        compiler_params=pltpu.CompilerParams(
            dimension_semantics=("parallel",),
            vmem_limit_bytes=vmem_limit,
        ),
        cost_estimate=cost,
    )(x_c, w1_c, b1_row, w2_row, b2_s)

    return out_row.reshape(B, 1)


def init_params(key, img_feature_dim, num_bottleneck=_HIDDEN):
    # Deterministic synthetic init mimicking torch.nn.Linear's
    # U(-1/sqrt(fan_in), 1/sqrt(fan_in)) scheme (weights stored as (in, out)).
    k1, k2, k3, k4 = jax.random.split(key, 4)
    s1 = 1.0 / jnp.sqrt(img_feature_dim)
    s2 = 1.0 / jnp.sqrt(num_bottleneck)
    w1 = jax.random.uniform(k1, (img_feature_dim, num_bottleneck),
                            jnp.float32, -s1, s1)
    b1 = jax.random.uniform(k2, (1, num_bottleneck), jnp.float32, -s1, s1)
    w2 = jax.random.uniform(k3, (num_bottleneck, 1), jnp.float32, -s2, s2)
    b2 = jax.random.uniform(k4, (1, 1), jnp.float32, -s2, s2)
    return w1, b1, w2, b2


def _reference(x, w1, b1, w2, b2, dtype=None):
    # Pure-JAX reference; dtype=None reproduces the f32 PyTorch semantics,
    # dtype=bfloat16 mirrors the kernel's matmul precision (f32 accumulation).
    xr = jnp.maximum(x, 0.0)
    w1r = w1
    if dtype is not None:
        xr, w1r = xr.astype(dtype), w1.astype(dtype)
    h = jnp.dot(xr, w1r, preferred_element_type=jnp.float32) + b1.reshape(1, -1)
    h = jnp.maximum(h, 0.0)
    return h @ w2.reshape(-1, 1) + b2.reshape(1, 1)


if __name__ == "__main__":
    key = jax.random.PRNGKey(0)
    kx1, kx2, kp = jax.random.split(key, 3)

    feature_dim = 32                       # img_feature_dim (args.feature_dim)
    w1, b1, w2, b2 = init_params(kp, feature_dim)

    # Case 1: batch large enough for a multi-step grid (two 256-wide lane-dense
    # output blocks, the second a partial 44-row tile).
    x_big = jax.random.normal(kx1, (300, feature_dim), dtype=jnp.float32)
    out_big = jax.block_until_ready(relation_module_forward(x_big, w1, b1, w2, b2))

    # Case 2: tiny batch -> single full-array block path (any B is legal there).
    x_small = jax.random.normal(kx2, (40, feature_dim), dtype=jnp.float32)
    out_small = jax.block_until_ready(
        relation_module_forward(x_small, w1, b1, w2, b2))

    for x, out in ((x_big, out_big), (x_small, out_small)):
        assert out.shape == (x.shape[0], 1)
        ref_matched = _reference(x, w1, b1, w2, b2, dtype=jnp.bfloat16)
        ref_f32 = _reference(x, w1, b1, w2, b2)
        # Tight check against a precision-matched reference...
        assert jnp.allclose(out, ref_matched, atol=5e-3, rtol=5e-3), \
            float(jnp.max(jnp.abs(out - ref_matched)))
        # ...and a wider check against the pure-f32 PyTorch semantics
        # (bf16 matmul operands, f32 accumulation).
        assert jnp.allclose(out, ref_f32, atol=5e-2, rtol=5e-2), \
            float(jnp.max(jnp.abs(out - ref_f32)))

    print("KERNEL_OK")
</pallas_src>

<mosaic_0001>
module attributes {stable_mosaic.version = 11 : i64} {
  func.func @_relation_kernel(%arg0: i32, %arg1: memref<256x32xbf16, #tpu.memory_space<vmem>>, %arg2: memref<32x256xbf16, #tpu.memory_space<vmem>>, %arg3: memref<1x256xf32, #tpu.memory_space<vmem>>, %arg4: memref<1x256xf32, #tpu.memory_space<vmem>>, %arg5: memref<1x1xf32, #tpu.memory_space<smem>>, %arg6: memref<1x256xf32, #tpu.memory_space<vmem>>) attributes {dimension_semantics = [#tpu.dimension_semantics<parallel>], iteration_bounds = array<i64: 2>, scalar_prefetch = 0 : i64, scratch_operands = 0 : i64, tpu.core_type = #tpu.core_type<tc>, window_params = [{transform_indices = @transform_0, window_bounds = array<i64: 256, 32>}, {pipeline_mode = #tpu.pipeline_mode<synchronous>, transform_indices = @transform_1, window_bounds = array<i64: 32, 256>}, {pipeline_mode = #tpu.pipeline_mode<synchronous>, transform_indices = @transform_2, window_bounds = array<i64: 1, 256>}, {pipeline_mode = #tpu.pipeline_mode<synchronous>, transform_indices = @transform_3, window_bounds = array<i64: 1, 256>}, {transform_indices = @transform_4, window_bounds = array<i64: 1, 1>}, {transform_indices = @transform_5, window_bounds = array<i64: 1, 256>}]} {
    %c0 = arith.constant 0 : index
    %c0_0 = arith.constant 0 : index
    %0 = vector.load %arg1[%c0, %c0_0] : memref<256x32xbf16, #tpu.memory_space<vmem>>, vector<256x32xbf16>
    %cst = arith.constant 0.000000e+00 : bf16
    %1 = vector.broadcast %cst : bf16 to vector<256x32xbf16>
    %2 = arith.maximumf %0, %1 : vector<256x32xbf16>
    %c0_1 = arith.constant 0 : index
    %c0_2 = arith.constant 0 : index
    %3 = vector.load %arg2[%c0_1, %c0_2] : memref<32x256xbf16, #tpu.memory_space<vmem>>, vector<32x256xbf16>
    %cst_3 = arith.constant dense<0.000000e+00> : vector<256x256xf32>
    %4 = tpu.matmul %2, %3, %cst_3 {dimension_numbers = #tpu.dot_dimension_numbers<[1], [0], [0], [1], [0, 0, 1, 1], [], []>} : vector<256x32xbf16>, vector<32x256xbf16>, vector<256x256xf32> -> vector<256x256xf32>
    %c0_4 = arith.constant 0 : index
    %c0_5 = arith.constant 0 : index
    %5 = vector.load %arg3[%c0_4, %c0_5] : memref<1x256xf32, #tpu.memory_space<vmem>>, vector<1x256xf32>
    %6 = vector.broadcast %5 : vector<1x256xf32> to vector<256x256xf32>
    %7 = arith.addf %4, %6 : vector<256x256xf32>
    %cst_6 = arith.constant 0.000000e+00 : f32
    %8 = vector.broadcast %cst_6 : f32 to vector<256x256xf32>
    %9 = arith.maximumf %7, %8 : vector<256x256xf32>
    %c0_7 = arith.constant 0 : index
    %c0_8 = arith.constant 0 : index
    %10 = vector.load %arg4[%c0_7, %c0_8] : memref<1x256xf32, #tpu.memory_space<vmem>>, vector<1x256xf32>
    %cst_9 = arith.constant dense<0.000000e+00> : vector<1x256xf32>
    %11 = tpu.matmul %10, %9, %cst_9 {dimension_numbers = #tpu.dot_dimension_numbers<[1], [1], [0], [0], [0, 0, 1, 0], [], []>} : vector<1x256xf32>, vector<256x256xf32>, vector<1x256xf32> -> vector<1x256xf32>
    %c0_10 = arith.constant 0 : index
    %c0_11 = arith.constant 0 : index
    %12 = memref.load %arg5[%c0_10, %c0_11] : memref<1x1xf32, #tpu.memory_space<smem>>
    %13 = vector.broadcast %12 : f32 to vector<1x256xf32>
    %14 = arith.addf %11, %13 : vector<1x256xf32>
    %c0_12 = arith.constant 0 : index
    %c0_13 = arith.constant 0 : index
    %15 = vector.load %arg6[%c0_12, %c0_13] : memref<1x256xf32, #tpu.memory_space<vmem>>, vector<1x256xf32>
    tpu.vector_store %arg6[%c0_12, %c0_13], %14 {strides = array<i32>} : memref<1x256xf32, #tpu.memory_space<vmem>>, vector<1x256xf32>,
    return
  }
  func.func @transform_0(%arg0: i32) -> (i32, i32) {
    %c0_i32 = arith.constant 0 : i32
    %c0_i32_0 = arith.constant 0 : i32
    return %arg0, %c0_i32 : i32, i32
  }
  func.func @transform_1(%arg0: i32) -> (i32, i32) {
    %c0_i32 = arith.constant 0 : i32
    %c0_i32_0 = arith.constant 0 : i32
    %c0_i32_1 = arith.constant 0 : i32
    return %c0_i32, %c0_i32_0 : i32, i32
  }
  func.func @transform_2(%arg0: i32) -> (i32, i32) {
    %c0_i32 = arith.constant 0 : i32
    %c0_i32_0 = arith.constant 0 : i32
    %c0_i32_1 = arith.constant 0 : i32
    return %c0_i32, %c0_i32_0 : i32, i32
  }
  func.func @transform_3(%arg0: i32) -> (i32, i32) {
    %c0_i32 = arith.constant 0 : i32
    %c0_i32_0 = arith.constant 0 : i32
    %c0_i32_1 = arith.constant 0 : i32
    return %c0_i32, %c0_i32_0 : i32, i32
  }
  func.func @transform_4(%arg0: i32) -> (i32, i32) {
    %c0_i32 = arith.constant 0 : i32
    %c0_i32_0 = arith.constant 0 : i32
    %c0_i32_1 = arith.constant 0 : i32
    return %c0_i32, %c0_i32_0 : i32, i32
  }
  func.func @transform_5(%arg0: i32) -> (i32, i32) {
    %c0_i32 = arith.constant 0 : i32
    %c0_i32_0 = arith.constant 0 : i32
    return %c0_i32, %arg0 : i32, i32
  }
}

</mosaic_0001>

<llo_original>
// kernel: tpu_custom_call.1
$region0: #{tpu_custom_call.1}
  #allocation0 [shape = 'u32[]', space=smem, size = 0x4, offset = 0x4, fixed_abs, tag = 'smem constant byte address 0x4 - core index']
  #allocation1 [shape = 'u32[144,128]{1,0:T(1,128)}', space=vmem, size = 0x12000, scoped, tag = 'internal scratch']
  #allocation2 [shape = 'f32[1,1]{1,0:T(1,128)S(6)}', space=smem, size = 0x200, scoped, tag = 'scoped memory for tpu_custom_call.1']
  %s0 = inlined_call_operand.vmem [shape: bf16[300,32], index: 0, kind: input, shape index: {}]
  %s1 = inlined_call_operand.vmem [shape: bf16[32,256], index: 1, kind: input, shape index: {}]
  %s2 = inlined_call_operand.vmem [shape: f32[1,256], index: 2, kind: input, shape index: {}]
  %s3 = inlined_call_operand.vmem [shape: f32[1,256], index: 3, kind: input, shape index: {}]
  %s4 = inlined_call_operand.<no memory space> [shape: f32[1,1], index: 4, kind: input, shape index: {}]
  %s5 = inlined_call_operand.hbm [shape: f32[1,300], index: 5, kind: output, shape index: {}]
  %s6 = sld [smem:[#allocation0]]
  $region53: #{tpu_custom_call.1} parent=0
    _
  %s8 = ssub.s32 1, %s6
  %s9 = scalar_select 0, %s8, %s6
  %10 = sst [smem:[#allocation2]] %s4
  $region1: #{tpu_custom_call.1} parent=0
    #allocation3 [shape = 'u8[2048]{0}', space=vmem, size = 0x800, scoped, tag = 'output window, operand 0']
    #allocation4 [shape = 's32[2]{0}', space=sflag, size = 0x8, scoped, tag = 'scoped memory for tpu_custom_call.1']
    %11 = vsyncpa [#allocation4], 0
    %s12 = scalar_lea.sflag [#allocation4], 1
    %13 = vsyncpa %s12, 0
    loop: start=0, step=1, limit=4
    $region2: #{tpu_custom_call.1} parent=1 // loop_pre_header
      _
    $region3: #{tpu_custom_call.1} parent=1 // loop_header
      %s15 = sphi 0, %s19
      %p16 = scmp.ge.s32.totalorder %s15, 4
      %s25 = sphi 0, %s27
      %s28 = sphi 0, %s25
      %s29 = sphi 0, %s28
      %s45 = sphi 0, %s29
      %s49 = sphi 0, %s49
      %s51 = sphi 0, %s49
      %s52 = sphi 0, %s51
      %s66 = sphi 0, %s52
      %s70 = sphi 0, %s70
      %s72 = sphi 0, %s70
      %s73 = sphi 0, %s72
      %s87 = sphi 0, %s73
      %s91 = sphi 0, %s91
      %s93 = sphi 0, %s91
      %s94 = sphi 0, %s93
      %s108 = sphi 0, %s94
      %s112 = sphi 0, %s112
      %s114 = sphi 0, %s112
      %s115 = sphi 0, %s114
      %s129 = sphi 0, %s115
      %s135 = sphi 0, %s137
      %s138 = sphi 0, %s135
      %s139 = sphi 0, %s138
      %s155 = sphi 0, %s139
    $region4: #{tpu_custom_call.1} parent=1 // loop_header_branch
      %18 = sbr.rel (%p16) target = $region8
    $region5: #{tpu_custom_call.1} parent=1 // loop_body
      %s20 = ssub.s32 %s15, 1
      %s21 = ssub.s32 %s15, 2
      %s22 = sadd.s32 %s15, 1
      %s23 = ssub.s32 %s15, %s22
      %p24 = scmp.eq.s32.totalorder %s23, 0
      %s26 = sadd.s32 %s25, 1
      %s27 = scalar_select %p24, %s25, %s26
      %p30 = pneg %p24
      %p31 = scmp.eq.s32.totalorder %s15, 1
      %p32 = por %p30, %p31
      %p33 = scmp.ne.s32.totalorder %s25, %s28
      %p34 = scmp.eq.s32.totalorder %s15, 0
      %p35 = por %p33, %p34
      %p36 = scmp.ne.s32.totalorder %s25, %s28
      %p37 = scmp.eq.s32.totalorder %s20, 1
      %p38 = por %p36, %p37
      %p39 = scmp.ne.s32.totalorder %s28, %s29
      %p40 = scmp.eq.s32.totalorder %s20, 0
      %p41 = por %p39, %p40
      %p42 = scmp.ne.s32.totalorder %s28, %s29
      %p43 = scmp.eq.s32.totalorder %s21, 1
      %p44 = por %p42, %p43
      %p46 = scmp.ne.s32.totalorder %s29, %s45
      %p47 = scmp.eq.s32.totalorder %s21, 0
      %p48 = por %p46, %p47
      %s50 = sadd.s32 %s49, 1
      %p53 = scmp.eq.s32.totalorder %s15, 1
      %p54 = scmp.ne.s32.totalorder %s49, %s51
      %p55 = scmp.eq.s32.totalorder %s15, 0
      %p56 = por %p54, %p55
      %p57 = scmp.ne.s32.totalorder %s49, %s51
      %p58 = scmp.eq.s32.totalorder %s20, 1
      %p59 = por %p57, %p58
      %p60 = scmp.ne.s32.totalorder %s51, %s52
      %p61 = scmp.eq.s32.totalorder %s20, 0
      %p62 = por %p60, %p61
      %p63 = scmp.ne.s32.totalorder %s51, %s52
      %p64 = scmp.eq.s32.totalorder %s21, 1
      %p65 = por %p63, %p64
      %p67 = scmp.ne.s32.totalorder %s52, %s66
      %p68 = scmp.eq.s32.totalorder %s21, 0
      %p69 = por %p67, %p68
      %s71 = sadd.s32 %s70, 1
      %p74 = scmp.eq.s32.totalorder %s15, 1
      %p75 = scmp.ne.s32.totalorder %s70, %s72
      %p76 = scmp.eq.s32.totalorder %s15, 0
      %p77 = por %p75, %p76
      %p78 = scmp.ne.s32.totalorder %s70, %s72
      %p79 = scmp.eq.s32.totalorder %s20, 1
      %p80 = por %p78, %p79
      %p81 = scmp.ne.s32.totalorder %s72, %s73
      %p82 = scmp.eq.s32.totalorder %s20, 0
      %p83 = por %p81, %p82
      %p84 = scmp.ne.s32.totalorder %s72, %s73
      %p85 = scmp.eq.s32.totalorder %s21, 1
      %p86 = por %p84, %p85
      %p88 = scmp.ne.s32.totalorder %s73, %s87
      %p89 = scmp.eq.s32.totalorder %s21, 0
      %p90 = por %p88, %p89
      %s92 = sadd.s32 %s91, 1
      %p95 = scmp.eq.s32.totalorder %s15, 1
      %p96 = scmp.ne.s32.totalorder %s91, %s93
      %p97 = scmp.eq.s32.totalorder %s15, 0
      %p98 = por %p96, %p97
      %p99 = scmp.ne.s32.totalorder %s91, %s93
      %p100 = scmp.eq.s32.totalorder %s20, 1
      %p101 = por %p99, %p100
      %p102 = scmp.ne.s32.totalorder %s93, %s94
      %p103 = scmp.eq.s32.totalorder %s20, 0
      %p104 = por %p102, %p103
      %p105 = scmp.ne.s32.totalorder %s93, %s94
      %p106 = scmp.eq.s32.totalorder %s21, 1
      %p107 = por %p105, %p106
      %p109 = scmp.ne.s32.totalorder %s94, %s108
      %p110 = scmp.eq.s32.totalorder %s21, 0
      %p111 = por %p109, %p110
      %s113 = sadd.s32 %s112, 1
      %p116 = scmp.eq.s32.totalorder %s15, 1
      %p117 = scmp.ne.s32.totalorder %s112, %s114
      %p118 = scmp.eq.s32.totalorder %s15, 0
      %p119 = por %p117, %p118
      %p120 = scmp.ne.s32.totalorder %s112, %s114
      %p121 = scmp.eq.s32.totalorder %s20, 1
      %p122 = por %p120, %p121
      %p123 = scmp.ne.s32.totalorder %s114, %s115
      %p124 = scmp.eq.s32.totalorder %s20, 0
      %p125 = por %p123, %p124
      %p126 = scmp.ne.s32.totalorder %s114, %s115
      %p127 = scmp.eq.s32.totalorder %s21, 1
      %p128 = por %p126, %p127
      %p130 = scmp.ne.s32.totalorder %s115, %s129
      %p131 = scmp.eq.s32.totalorder %s21, 0
      %p132 = por %p130, %p131
      %s133 = ssub.s32 %s15, %s22
      %p134 = scmp.eq.s32.totalorder %s133, 0
      %s136 = sadd.s32 %s135, 1
      %s137 = scalar_select %p134, %s135, %s136
      %p140 = pneg %p134
      %p141 = scmp.eq.s32.totalorder %s15, 1
      %p142 = por %p140, %p141
      %p143 = scmp.ne.s32.totalorder %s135, %s138
      %p144 = scmp.eq.s32.totalorder %s15, 0
      %p145 = por %p143, %p144
      %p146 = scmp.ne.s32.totalorder %s135, %s138
      %p147 = scmp.eq.s32.totalorder %s20, 1
      %p148 = por %p146, %p147
      %p149 = scmp.ne.s32.totalorder %s138, %s139
      %p150 = scmp.eq.s32.totalorder %s20, 0
      %p151 = por %p149, %p150
      %p152 = scmp.ne.s32.totalorder %s138, %s139
      %p153 = scmp.eq.s32.totalorder %s21, 1
      %p154 = por %p152, %p153
      %p156 = scmp.ne.s32.totalorder %s139, %s155
      %p157 = scmp.eq.s32.totalorder %s21, 0
      %p158 = por %p156, %p157
      %p159 = scmp.le.s32.totalorder 1, %s15
      %p160 = scmp.lt.s32.totalorder %s15, 3
      %p161 = pnand %p159, %p160
      %p162 = pneg %p161
      // Predicated region
      $region9: #{tpu_custom_call.1} parent=5 // pred_check
        _
      $region10: #{tpu_custom_call.1} parent=5 // pred_check_branch
        %164 = sbr.rel (%p161) target = $region12
      $region11: #{tpu_custom_call.1} parent=5 // pred_region
        %s165 = ssub.s32 %s15, 1
        // Predicated region
        $region13: #{tpu_custom_call.1} parent=11 // pred_check
          %p166 = pneg %p62
        $region14: #{tpu_custom_call.1} parent=11 // pred_check_branch
          %168 = sbr.rel (%p166) target = $region16
        $region15: #{tpu_custom_call.1} parent=11 // pred_region
          _
        $region16: #{tpu_custom_call.1} parent=11 // pred_fallthru
          _
        // Predicated region
        $region17: #{tpu_custom_call.1} parent=11 // pred_check
          %p169 = pneg %p83
        $region18: #{tpu_custom_call.1} parent=11 // pred_check_branch
          %171 = sbr.rel (%p169) target = $region20
        $region19: #{tpu_custom_call.1} parent=11 // pred_region
          _
        $region20: #{tpu_custom_call.1} parent=11 // pred_fallthru
          _
        // Predicated region
        $region21: #{tpu_custom_call.1} parent=11 // pred_check
          %p172 = pneg %p104
        $region22: #{tpu_custom_call.1} parent=11 // pred_check_branch
          %174 = sbr.rel (%p172) target = $region24
        $region23: #{tpu_custom_call.1} parent=11 // pred_region
          _
        $region24: #{tpu_custom_call.1} parent=11 // pred_fallthru
          _
        // Predicated region
        $region25: #{tpu_custom_call.1} parent=11 // pred_check
          %p175 = pneg %p125
        $region26: #{tpu_custom_call.1} parent=11 // pred_check_branch
          %177 = sbr.rel (%p175) target = $region28
        $region27: #{tpu_custom_call.1} parent=11 // pred_region
          _
        $region28: #{tpu_custom_call.1} parent=11 // pred_fallthru
          _
      $region12: #{tpu_custom_call.1} parent=5 // pred_fallthru
        _
      %p178 = scmp.lt.s32.totalorder %s15, 2
      // Predicated region
      $region29: #{tpu_custom_call.1} parent=5 // pred_check
        %p179 = pneg %p178
      $region30: #{tpu_custom_call.1} parent=5 // pred_check_branch
        %181 = sbr.rel (%p179) target = $region32
      $region31: #{tpu_custom_call.1} parent=5 // pred_region
        // Predicated region
        $region33: #{tpu_custom_call.1} parent=31 // pred_check
          %p182 = pneg %p35
        $region34: #{tpu_custom_call.1} parent=31 // pred_check_branch
          %184 = sbr.rel (%p182) target = $region36
        $region35: #{tpu_custom_call.1} parent=31 // pred_region
          %s185 = smul.u32 32, %s15
          %s186 = ssub.s32 38, %s185
          %p187 = scmp.lt.s32.totalorder %s186, 32
          %s188 = scalar_select %p187, %s186, 32
          %s189 = smul.u32 64, %s188
          %p190 = scmp.lt.s32.totalorder %s185, 37
          %s191 = scalar_select %p190, %s185, 37
          %s192 = smul.addr %s191, 4
          %s193 = scalar_lea.vmem %s0, %s192
          %s194 = smul.u32 32, %s15
          %s195 = ssub.s32 38, %s194
          %p196 = scmp.lt.s32.totalorder %s195, 32
          %s197 = scalar_select %p196, %s195, 32
          %s198 = smul.u32 64, %s197
        $region36: #{tpu_custom_call.1} parent=31 // pred_fallthru
          _
      $region32: #{tpu_custom_call.1} parent=5 // pred_fallthru
        _
      %p199 = scmp.le.s32.totalorder 1, %s15
      %p200 = scmp.lt.s32.totalorder %s15, 3
      %p201 = pnand %p199, %p200
      %p202 = pneg %p201
      // Predicated region
      $region37: #{tpu_custom_call.1} parent=5 // pred_check
        _
      $region38: #{tpu_custom_call.1} parent=5 // pred_check_branch
        %204 = sbr.rel (%p201) target = $region40
      $region39: #{tpu_custom_call.1} parent=5 // pred_region
        %s205 = ssub.s32 %s15, 1
        %s206 = smul.u32 32, %s20
        %s207 = ssub.s32 38, %s206
        %p208 = scmp.lt.s32.totalorder %s207, 32
        %s209 = scalar_select %p208, %s207, 32
        %s210 = smul.u32 64, %s209
        %p211 = scmp.lt.s32.totalorder %s206, 37
        %s212 = scalar_select %p211, %s206, 37
        %s213 = smul.addr %s212, 4
        %s214 = scalar_lea.vmem %s0, %s213
        %p215 = pneg %p41
        %p216 = pneg %p38
        %p217 = pneg %p62
        %p218 = pneg %p59
        %p219 = pneg %p83
        %p220 = pneg %p80
        %p221 = pneg %p104
        %p222 = pneg %p101
        %p223 = pneg %p125
        %p224 = pneg %p122
        %p225 = pneg %p151
        %p226 = pneg %p148
        %s227 = sand.u32 %s138, 1
        %s228 = scalar_lea.sflag [#allocation4], %s227
        %s229 = sand.u32 %s138, 1
        %s230 = smul.addr %s229, 2
        %s231 = scalar_lea.vmem [#allocation3], %s230
        %s232 = smul.u32 32, %s20
        %s233 = ssub.s32 38, %s232
        %p234 = scmp.lt.s32.totalorder %s233, 32
        %s235 = scalar_select %p234, %s233, 32
        %s236 = smul.u32 64, %s235
        %p237 = scmp.lt.s32.totalorder %s232, 37
        %s238 = scalar_select %p237, %s232, 37
        %s239 = smul.addr %s238, 4
        %s240 = scalar_lea.vmem %s0, %s239
        %s241 = smul.u32 32, %s20
        %s242 = ssub.s32 38, %s241
        %p243 = scmp.lt.s32.totalorder %s242, 32
        %s244 = scalar_select %p243, %s242, 32
        %s245 = smul.u32 64, %s244
        %s246 = smul.u32 2, %s20
        %s247 = ssub.s32 3, %s246
        %p248 = scmp.lt.s32.totalorder %s247, 2
        %s249 = scalar_select %p248, %s247, 2
        %s250 = smul.u32 16, %s249
        %v252 = vld [vmem:[%s240] sm:$0xf]
        %v253 = vld [vmem:[%s240 + $0x4] sm:$0xf]
        %v254 = vld [vmem:[%s240 + $0x8] sm:$0xf]
        %v255 = vld [vmem:[%s240 + $0xc] sm:$0xf]
        %v256 = vld [vmem:[%s240 + $0x10] sm:$0xf]
        %v257 = vld [vmem:[%s240 + $0x14] sm:$0xf]
        %v258 = vld [vmem:[%s240 + $0x18] sm:$0xf]
        %v259 = vld [vmem:[%s240 + $0x1c] sm:$0xf]
        %v260 = vld [vmem:[%s240 + $0x20] sm:$0xf]
        %v261 = vld [vmem:[%s240 + $0x24] sm:$0xf]
        %v262 = vld [vmem:[%s240 + $0x28] sm:$0xf]
        %v263 = vld [vmem:[%s240 + $0x2c] sm:$0xf]
        %v264 = vld [vmem:[%s240 + $0x30] sm:$0xf]
        %v265 = vld [vmem:[%s240 + $0x34] sm:$0xf]
        %v266 = vld [vmem:[%s240 + $0x38] sm:$0xf]
        %v267 = vld [vmem:[%s240 + $0x3c] sm:$0xf]
        %v268 = vld [vmem:[%s240 + $0x40] sm:$0xf]
        %v269 = vld [vmem:[%s240 + $0x44] sm:$0xf]
        %v270 = vld [vmem:[%s240 + $0x48] sm:$0xf]
        %v271 = vld [vmem:[%s240 + $0x4c] sm:$0xf]
        %v272 = vld [vmem:[%s240 + $0x50] sm:$0xf]
        %v273 = vld [vmem:[%s240 + $0x54] sm:$0xf]
        %v274 = vld [vmem:[%s240 + $0x58] sm:$0xf]
        %v275 = vld [vmem:[%s240 + $0x5c] sm:$0xf]
        %v276 = vld [vmem:[%s240 + $0x60] sm:$0xf]
        %v277 = vld [vmem:[%s240 + $0x64] sm:$0xf]
        %v278 = vld [vmem:[%s240 + $0x68] sm:$0xf]
        %v279 = vld [vmem:[%s240 + $0x6c] sm:$0xf]
        %v280 = vld [vmem:[%s240 + $0x70] sm:$0xf]
        %v281 = vld [vmem:[%s240 + $0x74] sm:$0xf]
        %v282 = vld [vmem:[%s240 + $0x78] sm:$0xf]
        %v283 = vld [vmem:[%s240 + $0x7c] sm:$0xf]
        %v284 = vmax.bf16 %v252, 0
        %v285 = vmax.bf16 %v253, 0
        %v286 = vmax.bf16 %v254, 0
        %v287 = vmax.bf16 %v255, 0
        %v288 = vmax.bf16 %v256, 0
        %v289 = vmax.bf16 %v257, 0
        %v290 = vmax.bf16 %v258, 0
        %v291 = vmax.bf16 %v259, 0
        %v292 = vmax.bf16 %v260, 0
        %v293 = vmax.bf16 %v261, 0
        %v294 = vmax.bf16 %v262, 0
        %v295 = vmax.bf16 %v263, 0
        %v296 = vmax.bf16 %v264, 0
        %v297 = vmax.bf16 %v265, 0
        %v298 = vmax.bf16 %v266, 0
        %v299 = vmax.bf16 %v267, 0
        %v300 = vmax.bf16 %v268, 0
        %v301 = vmax.bf16 %v269, 0
        %v302 = vmax.bf16 %v270, 0
        %v303 = vmax.bf16 %v271, 0
        %v304 = vmax.bf16 %v272, 0
        %v305 = vmax.bf16 %v273, 0
        %v306 = vmax.bf16 %v274, 0
        %v307 = vmax.bf16 %v275, 0
        %v308 = vmax.bf16 %v276, 0
        %v309 = vmax.bf16 %v277, 0
        %v310 = vmax.bf16 %v278, 0
        %v311 = vmax.bf16 %v279, 0
        %v312 = vmax.bf16 %v280, 0
        %v313 = vmax.bf16 %v281, 0
        %v314 = vmax.bf16 %v282, 0
        %v315 = vmax.bf16 %v283, 0
        %v316 = vld [vmem:[%s1] sm:$0xff]
        %v317 = vld [vmem:[%s1 + $0x8] sm:$0xff]
        %v318 = vld [vmem:[%s1 + $0x10] sm:$0xff]
        %v319 = vld [vmem:[%s1 + $0x18] sm:$0xff]
        %v320 = vld [vmem:[%s2] sm:$0x3]
        %v322 = vlaneseq
        %v323 = vshrl.u32 %v322, 7
        %v324 = vsub.s32 0, %v323
        %v325 = vrot.slane %v320, %v324
        %v326 = vlaneseq
        %v327 = vshrl.u32 %v326, 7
        %v328 = vsub.s32 1, %v327
        %v329 = vrot.slane %v320, %v328
        %v364 = vunpack.c.l.b16 %v284
        %v365 = vunpack.c.l.b16 %v285
        %v366 = vunpack.c.l.b16 %v286
        %v367 = vunpack.c.l.b16 %v287
        %v368 = vunpack.c.l.b16 %v288
        %v369 = vunpack.c.l.b16 %v289
        %v370 = vunpack.c.l.b16 %v290
        %v371 = vunpack.c.l.b16 %v291
        %v372 = vunpack.c.l.b16 %v292
        %v373 = vunpack.c.l.b16 %v293
        %v374 = vunpack.c.l.b16 %v294
        %v375 = vunpack.c.l.b16 %v295
        %v376 = vunpack.c.l.b16 %v296
        %v377 = vunpack.c.l.b16 %v297
        %v378 = vunpack.c.l.b16 %v298
        %v379 = vunpack.c.l.b16 %v299
        %v380 = vunpack.c.l.b16 %v300
        %v381 = vunpack.c.l.b16 %v301
        %v382 = vunpack.c.l.b16 %v302
        %v383 = vunpack.c.l.b16 %v303
        %v384 = vunpack.c.l.b16 %v304
        %v385 = vunpack.c.l.b16 %v305
        %v386 = vunpack.c.l.b16 %v306
        %v387 = vunpack.c.l.b16 %v307
        %v388 = vunpack.c.l.b16 %v308
        %v389 = vunpack.c.l.b16 %v309
        %v390 = vunpack.c.l.b16 %v310
        %v391 = vunpack.c.l.b16 %v311
        %v392 = vunpack.c.l.b16 %v312
        %v393 = vunpack.c.l.b16 %v313
        %v394 = vunpack.c.l.b16 %v314
        %v395 = vunpack.c.l.b16 %v315
        %v396 = vpack.c.b16 %v365, %v364
        %v397 = vpack.c.b16 %v367, %v366
        %v398 = vpack.c.b16 %v369, %v368
        %v399 = vpack.c.b16 %v371, %v370
        %v400 = vpack.c.b16 %v373, %v372
        %v401 = vpack.c.b16 %v375, %v374
        %v402 = vpack.c.b16 %v377, %v376
        %v403 = vpack.c.b16 %v379, %v378
        %v404 = vpack.c.b16 %v381, %v380
        %v405 = vpack.c.b16 %v383, %v382
        %v406 = vpack.c.b16 %v385, %v384
        %v407 = vpack.c.b16 %v387, %v386
        %v408 = vpack.c.b16 %v389, %v388
        %v409 = vpack.c.b16 %v391, %v390
        %v410 = vpack.c.b16 %v393, %v392
        %v411 = vpack.c.b16 %v395, %v394
        %v416 = vunpack.c.l.b16 %v316
        %v417 = vunpack.c.h.b16 %v316
        %v418 = vunpack.c.l.b16 %v317
        %v419 = vunpack.c.h.b16 %v317
        %v420 = vunpack.c.l.b16 %v318
        %v421 = vunpack.c.h.b16 %v318
        %v422 = vunpack.c.l.b16 %v319
        %v423 = vunpack.c.h.b16 %v319
        %v424 = vpack.c.b16 %v418, %v416
        %v425 = vpack.c.b16 %v419, %v417
        %v426 = vpack.c.b16 %v422, %v420
        %v427 = vpack.c.b16 %v423, %v421
        %vm432 = vcmask 261120
        %v434 = vsel %vm432, %v396, 0
        %v437 = vsel %vm432, %v397, 0
        %v440 = vsel %vm432, %v398, 0
        %v443 = vsel %vm432, %v399, 0
        %v446 = vsel %vm432, %v400, 0
        %v449 = vsel %vm432, %v401, 0
        %v452 = vsel %vm432, %v402, 0
        %v455 = vsel %vm432, %v403, 0
        %v458 = vsel %vm432, %v404, 0
        %v461 = vsel %vm432, %v405, 0
        %v464 = vsel %vm432, %v406, 0
        %v467 = vsel %vm432, %v407, 0
        %v470 = vsel %vm432, %v408, 0
        %v473 = vsel %vm432, %v409, 0
        %v476 = vsel %vm432, %v410, 0
        %v479 = vsel %vm432, %v411, 0
        %481 = vmatprep.subr.bf16.mxu0 %v425
        %482 = vmatpush1.bf16.msra.mxu0 %v424
        %483 = vmatprep.subr.bf16.mxu0 %v427
        %484 = vmatpush1.bf16.msra.mxu0 %v426
        %485 = vmatprep.subr.bf16.mxu0 0
        %486 = vmatpush1.bf16.msra.mxu0 0
        %487 = vmatprep.subr.bf16.mxu0 0
        %488 = vmatpush1.bf16.msra.mxu0 0
        %489 = vmatprep.subr.bf16.mxu0 0
        %490 = vmatpush1.bf16.msra.mxu0 0
        %491 = vmatprep.subr.bf16.mxu0 0
        %492 = vmatpush1.bf16.msra.mxu0 0
        %493 = vmatprep.subr.bf16.mxu0 0
        %494 = vmatpush1.bf16.msra.mxu0 0
        %495 = vmatprep.subr.bf16.mxu0 0
        %496 = vmatpush1.bf16.msra.mxu0 0
        %497 = vmatprep.subr.bf16.mxu0 0
        %498 = vmatpush1.bf16.msra.mxu0 0
        %499 = vmatprep.subr.bf16.mxu0 0
        %500 = vmatpush1.bf16.msra.mxu0 0
        %501 = vmatprep.subr.bf16.mxu0 0
        %502 = vmatpush1.bf16.msra.mxu0 0
        %503 = vmatprep.subr.bf16.mxu0 0
        %504 = vmatpush1.bf16.msra.mxu0 0
        %505 = vmatprep.subr.bf16.mxu0 0
        %506 = vmatpush1.bf16.msra.mxu0 0
        %507 = vmatprep.subr.bf16.mxu0 0
        %508 = vmatpush1.bf16.msra.mxu0 0
        %509 = vmatprep.subr.bf16.mxu0 0
        %510 = vmatpush1.bf16.msra.mxu0 0
        %511 = vmatprep.subr.bf16.mxu0 0
        %512 = vmatpush1.bf16.msra.mxu0 0
        %513 = vmatprep.mubr.bf16.mxu0 0
        %514 = vmatmul.mubr.bf16.gmra.mrb[0].mxu0 %v434
        %v515 = vpop.f32.mrb[0].mxu0
        %v516 = vadd.f32 %v325, %v515
        %v517 = vpop.f32.mrb[0].mxu0
        %v518 = vadd.f32 %v329, %v517
        %v519 = vpop.f32.mrb[0].mxu0
        %v520 = vadd.f32 %v325, %v519
        %v521 = vpop.f32.mrb[0].mxu0
        %v522 = vadd.f32 %v329, %v521
        %523 = vmatprep.mubr.bf16.mxu0 0
        %524 = vmatmul.mubr.bf16.gmra.mrb[0].mxu0 %v437
        %v525 = vpop.f32.mrb[0].mxu0
        %v526 = vadd.f32 %v325, %v525
        %v527 = vpop.f32.mrb[0].mxu0
        %v528 = vadd.f32 %v329, %v527
        %v529 = vpop.f32.mrb[0].mxu0
        %v530 = vadd.f32 %v325, %v529
        %v531 = vpop.f32.mrb[0].mxu0
        %v532 = vadd.f32 %v329, %v531
        %533 = vmatprep.mubr.bf16.mxu0 0
        %534 = vmatmul.mubr.bf16.gmra.mrb[0].mxu0 %v440
        %v535 = vpop.f32.mrb[0].mxu0
        %v536 = vadd.f32 %v325, %v535
        %v537 = vpop.f32.mrb[0].mxu0
        %v538 = vadd.f32 %v329, %v537
        %v539 = vpop.f32.mrb[0].mxu0
        %v540 = vadd.f32 %v325, %v539
        %v541 = vpop.f32.mrb[0].mxu0
        %v542 = vadd.f32 %v329, %v541
        %543 = vmatprep.mubr.bf16.mxu0 0
        %544 = vmatmul.mubr.bf16.gmra.mrb[0].mxu0 %v443
        %v545 = vpop.f32.mrb[0].mxu0
        %v546 = vadd.f32 %v325, %v545
        %v547 = vpop.f32.mrb[0].mxu0
        %v548 = vadd.f32 %v329, %v547
        %v549 = vpop.f32.mrb[0].mxu0
        %v550 = vadd.f32 %v325, %v549
        %v551 = vpop.f32.mrb[0].mxu0
        %v552 = vadd.f32 %v329, %v551
        %553 = vmatprep.mubr.bf16.mxu0 0
        %554 = vmatmul.mubr.bf16.gmra.mrb[0].mxu0 %v446
        %v555 = vpop.f32.mrb[0].mxu0
        %v556 = vadd.f32 %v325, %v555
        %v557 = vpop.f32.mrb[0].mxu0
        %v558 = vadd.f32 %v329, %v557
        %v559 = vpop.f32.mrb[0].mxu0
        %v560 = vadd.f32 %v325, %v559
        %v561 = vpop.f32.mrb[0].mxu0
        %v562 = vadd.f32 %v329, %v561
        %563 = vmatprep.mubr.bf16.mxu0 0
        %564 = vmatmul.mubr.bf16.gmra.mrb[0].mxu0 %v449
        %v565 = vpop.f32.mrb[0].mxu0
        %v566 = vadd.f32 %v325, %v565
        %v567 = vpop.f32.mrb[0].mxu0
        %v568 = vadd.f32 %v329, %v567
        %v569 = vpop.f32.mrb[0].mxu0
        %v570 = vadd.f32 %v325, %v569
        %v571 = vpop.f32.mrb[0].mxu0
        %v572 = vadd.f32 %v329, %v571
        %573 = vmatprep.mubr.bf16.mxu0 0
        %574 = vmatmul.mubr.bf16.gmra.mrb[0].mxu0 %v452
        %v575 = vpop.f32.mrb[0].mxu0
        %v576 = vadd.f32 %v325, %v575
        %v577 = vpop.f32.mrb[0].mxu0
        %v578 = vadd.f32 %v329, %v577
        %v579 = vpop.f32.mrb[0].mxu0
        %v580 = vadd.f32 %v325, %v579
        %v581 = vpop.f32.mrb[0].mxu0
        %v582 = vadd.f32 %v329, %v581
        %583 = vmatprep.mubr.bf16.mxu0 0
        %584 = vmatmul.mubr.bf16.gmra.mrb[0].mxu0 %v455
        %v585 = vpop.f32.mrb[0].mxu0
        %v586 = vadd.f32 %v325, %v585
        %v587 = vpop.f32.mrb[0].mxu0
        %v588 = vadd.f32 %v329, %v587
        %v589 = vpop.f32.mrb[0].mxu0
        %v590 = vadd.f32 %v325, %v589
        %v591 = vpop.f32.mrb[0].mxu0
        %v592 = vadd.f32 %v329, %v591
        %593 = vmatprep.mubr.bf16.mxu0 0
        %594 = vmatmul.mubr.bf16.gmra.mrb[0].mxu0 %v458
        %v595 = vpop.f32.mrb[0].mxu0
        %v596 = vadd.f32 %v325, %v595
        %v597 = vpop.f32.mrb[0].mxu0
        %v598 = vadd.f32 %v329, %v597
        %v599 = vpop.f32.mrb[0].mxu0
        %v600 = vadd.f32 %v325, %v599
        %v601 = vpop.f32.mrb[0].mxu0
        %v602 = vadd.f32 %v329, %v601
        %603 = vmatprep.mubr.bf16.mxu0 0
        %604 = vmatmul.mubr.bf16.gmra.mrb[0].mxu0 %v461
        %v605 = vpop.f32.mrb[0].mxu0
        %v606 = vadd.f32 %v325, %v605
        %v607 = vpop.f32.mrb[0].mxu0
        %v608 = vadd.f32 %v329, %v607
        %v609 = vpop.f32.mrb[0].mxu0
        %v610 = vadd.f32 %v325, %v609
        %v611 = vpop.f32.mrb[0].mxu0
        %v612 = vadd.f32 %v329, %v611
        %613 = vmatprep.mubr.bf16.mxu0 0
        %614 = vmatmul.mubr.bf16.gmra.mrb[0].mxu0 %v464
        %v615 = vpop.f32.mrb[0].mxu0
        %v616 = vadd.f32 %v325, %v615
        %v617 = vpop.f32.mrb[0].mxu0
        %v618 = vadd.f32 %v329, %v617
        %v619 = vpop.f32.mrb[0].mxu0
        %v620 = vadd.f32 %v325, %v619
        %v621 = vpop.f32.mrb[0].mxu0
        %v622 = vadd.f32 %v329, %v621
        %623 = vmatprep.mubr.bf16.mxu0 0
        %624 = vmatmul.mubr.bf16.gmra.mrb[0].mxu0 %v467
        %v625 = vpop.f32.mrb[0].mxu0
        %v626 = vadd.f32 %v325, %v625
        %v627 = vpop.f32.mrb[0].mxu0
        %v628 = vadd.f32 %v329, %v627
        %v629 = vpop.f32.mrb[0].mxu0
        %v630 = vadd.f32 %v325, %v629
        %v631 = vpop.f32.mrb[0].mxu0
        %v632 = vadd.f32 %v329, %v631
        %633 = vmatprep.mubr.bf16.mxu0 0
        %634 = vmatmul.mubr.bf16.gmra.mrb[0].mxu0 %v470
        %v635 = vpop.f32.mrb[0].mxu0
        %v636 = vadd.f32 %v325, %v635
        %v637 = vpop.f32.mrb[0].mxu0
        %v638 = vadd.f32 %v329, %v637
        %v639 = vpop.f32.mrb[0].mxu0
        %v640 = vadd.f32 %v325, %v639
        %v641 = vpop.f32.mrb[0].mxu0
        %v642 = vadd.f32 %v329, %v641
        %643 = vmatprep.mubr.bf16.mxu0 0
        %644 = vmatmul.mubr.bf16.gmra.mrb[0].mxu0 %v473
        %v645 = vpop.f32.mrb[0].mxu0
        %v646 = vadd.f32 %v325, %v645
        %v647 = vpop.f32.mrb[0].mxu0
        %v648 = vadd.f32 %v329, %v647
        %v649 = vpop.f32.mrb[0].mxu0
        %v650 = vadd.f32 %v325, %v649
        %v651 = vpop.f32.mrb[0].mxu0
        %v652 = vadd.f32 %v329, %v651
        %653 = vmatprep.mubr.bf16.mxu0 0
        %654 = vmatmul.mubr.bf16.gmra.mrb[0].mxu0 %v476
        %v655 = vpop.f32.mrb[0].mxu0
        %v656 = vadd.f32 %v325, %v655
        %v657 = vpop.f32.mrb[0].mxu0
        %v658 = vadd.f32 %v329, %v657
        %v659 = vpop.f32.mrb[0].mxu0
        %v660 = vadd.f32 %v325, %v659
        %v661 = vpop.f32.mrb[0].mxu0
        %v662 = vadd.f32 %v329, %v661
        %663 = vmatprep.mubr.bf16.mxu0 0
        %664 = vmatmul.mubr.bf16.gmra.mrb[0].mxu0 %v479
        %v665 = vpop.f32.mrb[0].mxu0
        %v666 = vadd.f32 %v325, %v665
        %v667 = vpop.f32.mrb[0].mxu0
        %v668 = vadd.f32 %v329, %v667
        %v669 = vpop.f32.mrb[0].mxu0
        %v670 = vadd.f32 %v325, %v669
        %v671 = vpop.f32.mrb[0].mxu0
        %v672 = vadd.f32 %v329, %v671
        %673 = vdwg.mxu0
        %v674 = vmax.f32 %v516, 0.0
        %v675 = vmax.f32 %v518, 0.0
        %v676 = vmax.f32 %v520, 0.0
        %v677 = vmax.f32 %v522, 0.0
        %v678 = vmax.f32 %v526, 0.0
        %v679 = vmax.f32 %v528, 0.0
        %v680 = vmax.f32 %v530, 0.0
        %v681 = vmax.f32 %v532, 0.0
        %v682 = vmax.f32 %v536, 0.0
        %v683 = vmax.f32 %v538, 0.0
        %v684 = vmax.f32 %v540, 0.0
        %v685 = vmax.f32 %v542, 0.0
        %v686 = vmax.f32 %v546, 0.0
        %v687 = vmax.f32 %v548, 0.0
        %v688 = vmax.f32 %v550, 0.0
        %v689 = vmax.f32 %v552, 0.0
        %v690 = vmax.f32 %v556, 0.0
        %v691 = vmax.f32 %v558, 0.0
        %v692 = vmax.f32 %v560, 0.0
        %v693 = vmax.f32 %v562, 0.0
        %v694 = vmax.f32 %v566, 0.0
        %v695 = vmax.f32 %v568, 0.0
        %v696 = vmax.f32 %v570, 0.0
        %v697 = vmax.f32 %v572, 0.0
        %v698 = vmax.f32 %v576, 0.0
        %v699 = vmax.f32 %v578, 0.0
        %v700 = vmax.f32 %v580, 0.0
        %v701 = vmax.f32 %v582, 0.0
        %v702 = vmax.f32 %v586, 0.0
        %v703 = vmax.f32 %v588, 0.0
        %v704 = vmax.f32 %v590, 0.0
        %v705 = vmax.f32 %v592, 0.0
        %v706 = vmax.f32 %v596, 0.0
        %v707 = vmax.f32 %v598, 0.0
        %v708 = vmax.f32 %v600, 0.0
        %v709 = vmax.f32 %v602, 0.0
        %v710 = vmax.f32 %v606, 0.0
        %v711 = vmax.f32 %v608, 0.0
        %v712 = vmax.f32 %v610, 0.0
        %v713 = vmax.f32 %v612, 0.0
        %v714 = vmax.f32 %v616, 0.0
        %v715 = vmax.f32 %v618, 0.0
        %v716 = vmax.f32 %v620, 0.0
        %v717 = vmax.f32 %v622, 0.0
        %v718 = vmax.f32 %v626, 0.0
        %v719 = vmax.f32 %v628, 0.0
        %v720 = vmax.f32 %v630, 0.0
        %v721 = vmax.f32 %v632, 0.0
        %v722 = vmax.f32 %v636, 0.0
        %v723 = vmax.f32 %v638, 0.0
        %v724 = vmax.f32 %v640, 0.0
        %v725 = vmax.f32 %v642, 0.0
        %v726 = vmax.f32 %v646, 0.0
        %v727 = vmax.f32 %v648, 0.0
        %v728 = vmax.f32 %v650, 0.0
        %v729 = vmax.f32 %v652, 0.0
        %v730 = vmax.f32 %v656, 0.0
        %v731 = vmax.f32 %v658, 0.0
        %v732 = vmax.f32 %v660, 0.0
        %v733 = vmax.f32 %v662, 0.0
        %v734 = vmax.f32 %v666, 0.0
        %v735 = vmax.f32 %v668, 0.0
        %v736 = vmax.f32 %v670, 0.0
        %v737 = vmax.f32 %v672, 0.0
        %v738 = vld [vmem:[%s3] sm:$0x3]
        %s739 = sld [smem:[#allocation2]]
        %v740 = vstv %s739
        %v742 = vlaneseq
        %v743 = vshrl.u32 %v742, 7
        %v744 = vsub.s32 0, %v743
        %v745 = vrot.slane %v738, %v744
        %v746 = vlaneseq
        %v747 = vshrl.u32 %v746, 7
        %v748 = vsub.s32 1, %v747
        %v749 = vrot.slane %v738, %v748
        %752 = vmatprep.subr.mxu0 %v675
        %753 = vmatpush1.xpose.msra.mxu0 %v674
        %754 = vmatprep.subr.mxu0 %v677
        %755 = vmatpush1.xpose.msra.mxu0 %v676
        %756 = vmatprep.subr.mxu0 %v679
        %757 = vmatpush1.xpose.msra.mxu0 %v678
        %758 = vmatprep.subr.mxu0 %v681
        %759 = vmatpush1.xpose.msra.mxu0 %v680
        %760 = vmatprep.subr.mxu0 %v683
        %761 = vmatpush1.xpose.msra.mxu0 %v682
        %762 = vmatprep.subr.mxu0 %v685
        %763 = vmatpush1.xpose.msra.mxu0 %v684
        %764 = vmatprep.subr.mxu0 %v687
        %765 = vmatpush1.xpose.msra.mxu0 %v686
        %766 = vmatprep.subr.mxu0 %v689
        %767 = vmatpush1.xpose.msra.mxu0 %v688
        %768 = vmatprep.subr.mxu0 %v691
        %769 = vmatpush1.xpose.msra.mxu0 %v690
        %770 = vmatprep.subr.mxu0 %v693
        %771 = vmatpush1.xpose.msra.mxu0 %v692
        %772 = vmatprep.subr.mxu0 %v695
        %773 = vmatpush1.xpose.msra.mxu0 %v694
        %774 = vmatprep.subr.mxu0 %v697
        %775 = vmatpush1.xpose.msra.mxu0 %v696
        %776 = vmatprep.subr.mxu0 %v699
        %777 = vmatpush1.xpose.msra.mxu0 %v698
        %778 = vmatprep.subr.mxu0 %v701
        %779 = vmatpush1.xpose.msra.mxu0 %v700
        %780 = vmatprep.subr.mxu0 %v703
        %781 = vmatpush1.xpose.msra.mxu0 %v702
        %782 = vmatprep.subr.mxu0 %v705
        %783 = vmatpush1.xpose.msra.mxu0 %v704
        %784 = vmatprep.subr.mxu0 %v707
        %785 = vmatpush1.xpose.msra.mxu0 %v706
        %786 = vmatprep.subr.mxu0 %v709
        %787 = vmatpush1.xpose.msra.mxu0 %v708
        %788 = vmatprep.subr.mxu0 %v711
        %789 = vmatpush1.xpose.msra.mxu0 %v710
        %790 = vmatprep.subr.mxu0 %v713
        %791 = vmatpush1.xpose.msra.mxu0 %v712
        %792 = vmatprep.subr.mxu0 %v715
        %793 = vmatpush1.xpose.msra.mxu0 %v714
        %794 = vmatprep.subr.mxu0 %v717
        %795 = vmatpush1.xpose.msra.mxu0 %v716
        %796 = vmatprep.subr.mxu0 %v719
        %797 = vmatpush1.xpose.msra.mxu0 %v718
        %798 = vmatprep.subr.mxu0 %v721
        %799 = vmatpush1.xpose.msra.mxu0 %v720
        %800 = vmatprep.subr.mxu0 %v723
        %801 = vmatpush1.xpose.msra.mxu0 %v722
        %802 = vmatprep.subr.mxu0 %v725
        %803 = vmatpush1.xpose.msra.mxu0 %v724
        %804 = vmatprep.subr.mxu0 %v727
        %805 = vmatpush1.xpose.msra.mxu0 %v726
        %806 = vmatprep.subr.mxu0 %v729
        %807 = vmatpush1.xpose.msra.mxu0 %v728
        %808 = vmatprep.subr.mxu0 %v731
        %809 = vmatpush1.xpose.msra.mxu0 %v730
        %810 = vmatprep.subr.mxu0 %v733
        %811 = vmatpush1.xpose.msra.mxu0 %v732
        %812 = vmatprep.subr.mxu0 %v735
        %813 = vmatpush1.xpose.msra.mxu0 %v734
        %814 = vmatprep.subr.mxu0 %v737
        %815 = vmatpush1.xpose.msra.mxu0 %v736
        %816 = vmatprep.mubr.f32.mxu0 %v749
        %817 = vmatmul.mubr.f32.gmra.mrb[0].mxu0 %v745
        %v818 = vpop.f32.mrb[0].mxu0
        %v819 = vadd.f32 %v740, %v818
        %v820 = vpop.f32.mrb[0].mxu0
        %v821 = vadd.f32 %v740, %v820
        %822 = vdwg.mxu0
        %v825 = vcombine.low %v819, %v821
        %v827 = vunpack.c.l.s4 1966171168
        %v828 = vunpack.c.0.s8 %v827
        %v829 = vlaneseq
        %v830 = vshrl.u32 %v829, 7
        %v831 = vsub.s32 %v828, %v830
        %v832 = vrot.slane %v825, %v831
        %v834 = vunpack.c.l.s4 1966171168
        %v835 = vunpack.c.0.s8 %v834
        %v836 = vlaneseq
        %v837 = vshrl.u32 %v836, 7
        %v838 = vsub.s32 %v835, %v837
        %v839 = vrot.slane %v832, %v838
        %v841 = vlaneseq
        %vm842 = vcmp.ge.s32.totalorder %v841, 0
        %vm843 = vcmp.lt.s32.totalorder %v841, 256
        %vm844 = vmand %vm842, %vm843
        %845 = vst.msk [vmem:[%s231] sm:$0x3] %vm844, %v839
        %s846 = sand.u32 %s138, 1
        %s847 = scalar_lea.sflag [#allocation4], %s846
        %s848 = sand.u32 %s138, 1
        %s849 = smul.addr %s848, 2
        %s850 = scalar_lea.vmem [#allocation3], %s849
        // Predicated region
        $region41: #{tpu_custom_call.1} parent=39 // pred_check
          %p851 = pneg %p148
        $region42: #{tpu_custom_call.1} parent=39 // pred_check_branch
          %853 = sbr.rel (%p851) target = $region44
        $region43: #{tpu_custom_call.1} parent=39 // pred_region
          %s854 = smul.u32 2, %s20
          %s855 = ssub.s32 3, %s854
          %p856 = scmp.lt.s32.totalorder %s855, 2
          %s857 = scalar_select %p856, %s855, 2
          %s858 = smul.u32 16, %s857
          %s860 = ssub.s32 32, %s858
          %861 = vsyncadd %s847, %s860
          %p862 = scmp.ne.s32.totalorder 0, %s858
          %s863 = smul.addr %s854, 16
          %s864 = scalar_lea.hbm %s5, %s863
          %s865 = sshll.u32 %s857, 4
          %s866 = sshll.u32 %s850, 4
          %s867 = int_to_ptr.vmem [resolvable:$true] %s866
          %869 = dma.vmem_to_hbm [thread:$0]  (%p862), %s867, %s865, %s864, %s847
        $region44: #{tpu_custom_call.1} parent=39 // pred_fallthru
          _
      $region40: #{tpu_custom_call.1} parent=5 // pred_fallthru
        _
      %p870 = scmp.le.s32.totalorder 2, %s15
      // Predicated region
      $region45: #{tpu_custom_call.1} parent=5 // pred_check
        %p871 = pneg %p870
      $region46: #{tpu_custom_call.1} parent=5 // pred_check_branch
        %873 = sbr.rel (%p871) target = $region48
      $region47: #{tpu_custom_call.1} parent=5 // pred_region
        %s874 = ssub.s32 %s15, 2
        // Predicated region
        $region49: #{tpu_custom_call.1} parent=47 // pred_check
          %p875 = pneg %p154
        $region50: #{tpu_custom_call.1} parent=47 // pred_check_branch
          %877 = sbr.rel (%p875) target = $region52
        $region51: #{tpu_custom_call.1} parent=47 // pred_region
          %s878 = sand.u32 %s139, 1
          %s879 = scalar_lea.sflag [#allocation4], %s878
          %s880 = sand.u32 %s139, 1
          %s881 = smul.addr %s880, 2
          %s882 = scalar_lea.vmem [#allocation3], %s881
          %883 = dma.done %s879, 32
        $region52: #{tpu_custom_call.1} parent=47 // pred_fallthru
          _
      $region48: #{tpu_custom_call.1} parent=5 // pred_fallthru
        _
    $region6: #{tpu_custom_call.1} parent=1 // loop_footer
      %s19 = sadd.s32 1, %s15
    $region7: #{tpu_custom_call.1} parent=1 // loop_footer_branch
      %14 = sbr.rel target = $region3
    $region8: #{tpu_custom_call.1} parent=1 // loop_exit
      _
    %884 = vsyncpa [#allocation4], 1
    %s885 = scalar_lea.sflag [#allocation4], 1
    %886 = vsyncpa %s885, 1

</llo_original>
